<compile_context>
chip_gen: v7x
topology: tpu7x:2x2x1
jax: 0.10.0
libtpu: 0.0.40
codegen_flags: <defaults>
</compile_context>

<pallas_src>
import jax
import jax.numpy as jnp
from jax.experimental import pallas as pl
from jax.experimental.pallas import tpu as pltpu


def _pos_emb_kernel(x_ref, w_ref, o_ref):
    # Elementwise add; weight broadcasts over the batch sublane(s) of the block.
    o_ref[...] = (x_ref[...] + w_ref[...]).astype(o_ref.dtype)


def _pick_tile(size: int, target: int, multiple: int) -> int:
    """Pick a legal block dim <= target.

    Full-extent dims are always legal; otherwise prefer a divisor of `size`
    that is a multiple of `multiple`, falling back to `target` rounded down to
    `multiple` (Pallas handles the partial trailing block)."""
    if size <= target:
        return size
    t = (target // multiple) * multiple
    cand = t
    while cand >= multiple:
        if size % cand == 0:
            return cand
        cand -= multiple
    return t


def pos_embeddings_forward(x: jax.Array, weight: jax.Array, *, force_pallas: bool = False) -> jax.Array:
    """x: (B, L, D); weight: (1, L, D) -> (B, L, D).  Same semantics as PyTorch x + self.weight."""
    B, L, D = x.shape
    assert weight.shape == (1, L, D)
    w = weight.astype(x.dtype)

    # Tiny problems: pallas_call launch + per-step overhead dwarfs the work; let XLA fuse it.
    if not force_pallas and x.size < (1 << 15):
        return x + w

    itemsize = jnp.dtype(x.dtype).itemsize
    sub = {4: 8, 2: 16, 1: 32}.get(itemsize, 8)  # sublane multiple per dtype packing

    if D < 128:
        # Lane-sparse last dim -> flatten (L, D) into one lane-dense axis so the
        # store path is unmasked full-width vst.  Broadcast is only over batch,
        # so the flattened add is exactly equivalent.
        LD = L * D
        xf = x.reshape(B, LD)
        wf = w.reshape(1, LD)
        max_elems = 128 * 1024  # per x tile (~512 KiB f32) -> ~3 MiB total double-buffered
        t_target = max(128, min(LD, (max_elems // max(B, 1)) // 128 * 128))
        T = _pick_tile(LD, t_target, 128)
        n_t = pl.cdiv(LD, T)
        out = pl.pallas_call(
            _pos_emb_kernel,
            out_shape=jax.ShapeDtypeStruct((B, LD), x.dtype),
            grid_spec=pltpu.PrefetchScalarGridSpec(
                num_scalar_prefetch=0,
                grid=(n_t,),
                in_specs=[
                    pl.BlockSpec((B, T), lambda t: (0, t)),   # full batch extent, lane-dense tile
                    pl.BlockSpec((1, T), lambda t: (0, t)),   # weight tile, broadcast over batch
                ],
                out_specs=pl.BlockSpec((B, T), lambda t: (0, t)),
            ),
            compiler_params=pltpu.CompilerParams(
                dimension_semantics=("parallel",),
            ),
        )(xf, wf)
        return out.reshape(B, L, D)

    # Lane-dense D: tile the (L, D) plane.  Grid ordered (L-tiles, D-tiles, B) so
    # the weight block index only changes on the slow axes and stays resident
    # across the batch iterations.
    TL = _pick_tile(L, 256, sub)
    TD = _pick_tile(D, 512, 128)
    n_l = pl.cdiv(L, TL)
    n_d = pl.cdiv(D, TD)
    return pl.pallas_call(
        _pos_emb_kernel,
        out_shape=jax.ShapeDtypeStruct((B, L, D), x.dtype),
        grid_spec=pltpu.PrefetchScalarGridSpec(
            num_scalar_prefetch=0,
            grid=(n_l, n_d, B),
            in_specs=[
                pl.BlockSpec((1, TL, TD), lambda l, d, b: (b, l, d)),
                pl.BlockSpec((1, TL, TD), lambda l, d, b: (0, l, d)),  # constant over fast batch axis
            ],
            out_specs=pl.BlockSpec((1, TL, TD), lambda l, d, b: (b, l, d)),
        ),
        compiler_params=pltpu.CompilerParams(
            dimension_semantics=("parallel", "parallel", "parallel"),
        ),
    )(x, w)


def init_pos_embeddings(key, max_len: int, dim: int, dtype=jnp.float32):
    # trunc_normal_(std=0.02): truncated normal (+/- 2 std) scaled by 0.02
    return jax.random.truncated_normal(key, -2.0, 2.0, (1, max_len, dim), dtype) * 0.02


if __name__ == "__main__":
    key = jax.random.PRNGKey(0)
    k1, k2, k3, k4 = jax.random.split(key, 4)

    # Test 1: module-sized tiny shapes (D=32 < 128 -> flattened lane-dense path).
    B, max_len, dim = 2, 8, 32
    x = jax.random.normal(k1, (B, max_len, dim), dtype=jnp.float32)
    weight = init_pos_embeddings(k2, max_len, dim)
    out = jax.block_until_ready(pos_embeddings_forward(x, weight, force_pallas=True))
    ref = x + weight
    assert out.shape == (B, max_len, dim)
    assert jnp.allclose(out, ref, atol=1e-6), "mismatch vs reference (flattened path)"

    # Test 2: lane-dense shapes exercising the 3-D tiled path (grid = (2, 2, 2)).
    B2, L2, D2 = 2, 512, 1024
    x2 = jax.random.normal(k3, (B2, L2, D2), dtype=jnp.float32)
    weight2 = init_pos_embeddings(k4, L2, D2)
    out2 = jax.block_until_ready(pos_embeddings_forward(x2, weight2, force_pallas=True))
    ref2 = x2 + weight2
    assert out2.shape == (B2, L2, D2)
    assert jnp.allclose(out2, ref2, atol=1e-6), "mismatch vs reference (tiled path)"

    print("KERNEL_OK")
</pallas_src>

<mosaic_0001>
module attributes {stable_mosaic.version = 11 : i64} {
  func.func @_pos_emb_kernel(%arg0: i32, %arg1: memref<2x256xf32, #tpu.memory_space<vmem>>, %arg2: memref<1x256xf32, #tpu.memory_space<vmem>>, %arg3: memref<2x256xf32, #tpu.memory_space<vmem>>) attributes {dimension_semantics = [#tpu.dimension_semantics<parallel>], iteration_bounds = array<i64: 1>, scalar_prefetch = 0 : i64, scratch_operands = 0 : i64, tpu.core_type = #tpu.core_type<tc>, window_params = [{transform_indices = @transform_0, window_bounds = array<i64: 2, 256>}, {transform_indices = @transform_1, window_bounds = array<i64: 1, 256>}, {transform_indices = @transform_2, window_bounds = array<i64: 2, 256>}]} {
    %c0 = arith.constant 0 : index
    %c0_0 = arith.constant 0 : index
    %0 = vector.load %arg1[%c0, %c0_0] : memref<2x256xf32, #tpu.memory_space<vmem>>, vector<2x256xf32>
    %c0_1 = arith.constant 0 : index
    %c0_2 = arith.constant 0 : index
    %1 = vector.load %arg2[%c0_1, %c0_2] : memref<1x256xf32, #tpu.memory_space<vmem>>, vector<1x256xf32>
    %2 = vector.broadcast %1 : vector<1x256xf32> to vector<2x256xf32>
    %3 = arith.addf %0, %2 : vector<2x256xf32>
    %c0_3 = arith.constant 0 : index
    %c0_4 = arith.constant 0 : index
    %4 = vector.load %arg3[%c0_3, %c0_4] : memref<2x256xf32, #tpu.memory_space<vmem>>, vector<2x256xf32>
    tpu.vector_store %arg3[%c0_3, %c0_4], %3 {strides = array<i32>} : memref<2x256xf32, #tpu.memory_space<vmem>>, vector<2x256xf32>,
    return
  }
  func.func @transform_0(%arg0: i32) -> (i32, i32) {
    %c0_i32 = arith.constant 0 : i32
    %c0_i32_0 = arith.constant 0 : i32
    return %c0_i32, %arg0 : i32, i32
  }
  func.func @transform_1(%arg0: i32) -> (i32, i32) {
    %c0_i32 = arith.constant 0 : i32
    %c0_i32_0 = arith.constant 0 : i32
    return %c0_i32, %arg0 : i32, i32
  }
  func.func @transform_2(%arg0: i32) -> (i32, i32) {
    %c0_i32 = arith.constant 0 : i32
    %c0_i32_0 = arith.constant 0 : i32
    return %c0_i32, %arg0 : i32, i32
  }
}

</mosaic_0001>

<llo_original>
// kernel: tpu_custom_call.1
$region0: #{tpu_custom_call.1}
  #allocation0 [shape = 'u32[]', space=smem, size = 0x4, offset = 0x4, fixed_abs, tag = 'smem constant byte address 0x4 - core index']
  #allocation1 [shape = 'u32[144,128]{1,0:T(1,128)}', space=vmem, size = 0x12000, scoped, tag = 'internal scratch']
  %s0 = inlined_call_operand.hbm [shape: f32[2,256], index: 0, kind: input, shape index: {}]
  %s1 = inlined_call_operand.vmem [shape: f32[1,256], index: 1, kind: input, shape index: {}]
  %s2 = inlined_call_operand.hbm [shape: f32[2,256], index: 2, kind: output, shape index: {}]
  %s3 = sld [smem:[#allocation0]]
  $region22: #{tpu_custom_call.1} parent=0
    _
  %s5 = ssub.s32 1, %s3
  %s6 = scalar_select 0, %s5, %s3
  $region1: #{tpu_custom_call.1} parent=0
    #allocation2 [shape = 'u8[2048]{0}', space=vmem, size = 0x800, scoped, tag = 'input window, operand 0, single buffered']
    #allocation3 [shape = 's32[1]{0}', space=sflag, size = 0x4, scoped, tag = 'scoped memory for tpu_custom_call.1']
    #allocation4 [shape = 's32[1]{0}', space=sflag, size = 0x4, scoped, tag = 'scoped memory for tpu_custom_call.1']
    #allocation5 [shape = 'u8[2048]{0}', space=vmem, size = 0x800, scoped, tag = 'output window, operand 0, single buffered']
    %7 = vsyncpa [#allocation3], 0
    %8 = vsyncpa [#allocation4], 0
    // Predicated region
    $region2: #{tpu_custom_call.1} parent=1 // pred_check
      _
    $region3: #{tpu_custom_call.1} parent=1 // pred_check_branch
      %10 = sbr.rel (0) target = $region5
    $region4: #{tpu_custom_call.1} parent=1 // pred_region
      %s12 = ssub.s32 64, 64
      %13 = vsyncadd [#allocation3], %s12
      %s15 = sshll.u32 [#allocation2], 4
      %s16 = int_to_ptr.vmem [resolvable:$true] %s15
      %18 = dma.hbm_to_vmem [thread:$0]  %s0, 64, %s16, [#allocation3]
    $region5: #{tpu_custom_call.1} parent=1 // pred_fallthru
      _
    // Predicated region
    $region6: #{tpu_custom_call.1} parent=1 // pred_check
      _
    $region7: #{tpu_custom_call.1} parent=1 // pred_check_branch
      %20 = sbr.rel (0) target = $region9
    $region8: #{tpu_custom_call.1} parent=1 // pred_region
      _
    $region9: #{tpu_custom_call.1} parent=1 // pred_fallthru
      _
    // Predicated region
    $region10: #{tpu_custom_call.1} parent=1 // pred_check
      _
    $region11: #{tpu_custom_call.1} parent=1 // pred_check_branch
      %22 = sbr.rel (0) target = $region13
    $region12: #{tpu_custom_call.1} parent=1 // pred_region
      %23 = dma.done [#allocation3], 64
    $region13: #{tpu_custom_call.1} parent=1 // pred_fallthru
      _
    %v24 = vld [vmem:[#allocation2] sm:$0xf]
    %v25 = vld [vmem:[%s1] sm:$0x3]
    %v27 = vlaneseq
    %v28 = vshrl.u32 %v27, 7
    %v29 = vsub.s32 0, %v28
    %v30 = vrot.slane %v25, %v29
    %v31 = vlaneseq
    %v32 = vshrl.u32 %v31, 7
    %v33 = vsub.s32 1, %v32
    %v34 = vrot.slane %v25, %v33
    %v35 = vcombine.low %v30, %v34
    %v37 = vunpack.c.l.s4 1983009808
    %v38 = vunpack.c.0.s8 %v37
    %v39 = vlaneseq
    %v40 = vshrl.u32 %v39, 7
    %v41 = vsub.s32 %v38, %v40
    %v42 = vrot.slane %v35, %v41
    %v44 = vadd.f32 %v24, %v42
    %45 = vst [vmem:[#allocation5] sm:$0xf] %v44
    // Predicated region
    $region14: #{tpu_custom_call.1} parent=1 // pred_check
      _
    $region15: #{tpu_custom_call.1} parent=1 // pred_check_branch
      %47 = sbr.rel (0) target = $region17
    $region16: #{tpu_custom_call.1} parent=1 // pred_region
      %s49 = ssub.s32 64, 64
      %50 = vsyncadd [#allocation4], %s49
      %s52 = sshll.u32 [#allocation5], 4
      %s53 = int_to_ptr.vmem [resolvable:$true] %s52
      %55 = dma.vmem_to_hbm [thread:$0]  %s53, 64, %s2, [#allocation4]
    $region17: #{tpu_custom_call.1} parent=1 // pred_fallthru
      _
    // Predicated region
    $region18: #{tpu_custom_call.1} parent=1 // pred_check
      _
    $region19: #{tpu_custom_call.1} parent=1 // pred_check_branch
      %57 = sbr.rel (0) target = $region21
    $region20: #{tpu_custom_call.1} parent=1 // pred_region
      %58 = dma.done [#allocation4], 64
    $region21: #{tpu_custom_call.1} parent=1 // pred_fallthru
      _
    %59 = vsyncpa [#allocation3], 1
    %60 = vsyncpa [#allocation4], 1

</llo_original>
